<compile_context>
chip_gen: v7x
topology: tpu7x:2x2x1
jax: 0.10.0
libtpu: 0.0.40
codegen_flags: <defaults>
</compile_context>

<pallas_src>
import jax
import jax.numpy as jnp
from jax import lax
from jax.experimental import pallas as pl
from jax.experimental.pallas import tpu as pltpu


def _tpu_generation() -> str:
    """Best-effort TPU generation detection ('v5e' | 'v6e' | 'v7x')."""
    try:
        kind = jax.devices()[0].device_kind.lower()
    except Exception:  # pragma: no cover - defensive
        return "v6e"
    if "v5" in kind:
        return "v5e"
    if "v7" in kind or "7x" in kind:
        return "v7x"
    return "v6e"


def _stripe_params(generation: str):
    """(MIN_STRIPE_BYTES, MAX_STRIPES) per generation.

    v5e: a single large descriptor already saturates ~0.8 TB/s -> few stripes.
    v7x: ~3.2 TB/s means small stripes finish in ~2.5 us; use more / larger
         descriptors so several are always in flight.
    """
    if generation == "v5e":
        return 4 * 1024 * 1024, 2
    if generation == "v7x":
        return 8 * 1024 * 1024, 12
    return 4 * 1024 * 1024, 4  # v6e default


def _make_dma_kernel(stripe_starts, stripe_rows):
    """Kernel that copies embeddings[:seq_len, :] -> out via direct HBM->HBM
    DMAs, one per row stripe, with no VMEM staging."""
    n_stripes = len(stripe_starts)

    def kernel(emb_hbm, out_hbm, sems):
        copies = []
        # Issue all stripe DMAs first so they are in flight concurrently ...
        for s in range(n_stripes):
            start = stripe_starts[s]
            rows = stripe_rows[s]
            cp = pltpu.make_async_copy(
                emb_hbm.at[pl.ds(start, rows), :],
                out_hbm.at[pl.ds(start, rows), :],
                sems.at[s],
            )
            cp.start()
            copies.append(cp)
        # ... then wait on all of them.
        for cp in copies:
            cp.wait()

    return kernel


# Below this many bytes the Pallas custom-call overhead dominates; a plain
# XLA slice is cheaper and can fuse into the consumer.
_SMALL_COPY_BYTES = 1 << 20  # 1 MiB


def pos_embed(embeddings: jax.Array, x: jax.Array, *, force_pallas: bool = False) -> jax.Array:
    """Return embeddings[:x.shape[0], :].

    embeddings: (max_seq_len, hidden_size)
    x:          any array whose leading dim is the sequence length
    force_pallas: skip the XLA-slice fast path (used for testing the kernel
                  at small shapes).
    """
    seq_len = x.shape[0]
    max_seq_len, hidden = embeddings.shape
    if seq_len > max_seq_len:
        raise ValueError(f"seq_len={seq_len} exceeds max_seq_len={max_seq_len}")

    # Fast path: full-length slice is an identity — no copy, no custom call.
    if seq_len == max_seq_len:
        return embeddings

    # Degenerate case: nothing to copy (avoids a zero-sized kernel).
    if seq_len == 0:
        return jnp.zeros((0, hidden), dtype=embeddings.dtype)

    itemsize = jnp.dtype(embeddings.dtype).itemsize
    total_bytes = seq_len * hidden * itemsize

    # Fast path: tiny copies go through XLA (fusable, no custom-call launch).
    if total_bytes < _SMALL_COPY_BYTES and not force_pallas:
        return lax.slice(embeddings, (0, 0), (seq_len, hidden))

    # --- Pallas HBM->HBM striped-DMA path -----------------------------------
    min_stripe_bytes, max_stripes = _stripe_params(_tpu_generation())
    n_stripes = int(max(1, min(max_stripes, total_bytes // max(1, min_stripe_bytes))))

    rows_per_stripe = -(-seq_len // n_stripes)  # ceil-div
    # Align stripe boundaries to the dtype-packed sublane tile (8 rows f32,
    # 16 rows bf16, 32 rows int8/fp8) so no stripe splits a packed HBM tile.
    # The last stripe absorbs the (possibly sub-tile) remainder, which the DMA
    # handles as a (slower, but correct) partial-tile copy.
    sublane_tile = 8 * max(1, 4 // itemsize)
    rows_per_stripe = ((rows_per_stripe + sublane_tile - 1) // sublane_tile) * sublane_tile
    stripe_starts = tuple(range(0, seq_len, rows_per_stripe))
    stripe_rows = tuple(min(rows_per_stripe, seq_len - s) for s in stripe_starts)
    n_stripes = len(stripe_starts)
    # Coverage sanity check: stripes tile [0, seq_len) exactly.
    assert sum(stripe_rows) == seq_len
    assert all(stripe_starts[i] + stripe_rows[i] == (
        stripe_starts[i + 1] if i + 1 < n_stripes else seq_len) for i in range(n_stripes))

    kernel = _make_dma_kernel(stripe_starts, stripe_rows)

    return pl.pallas_call(
        kernel,
        out_shape=jax.ShapeDtypeStruct((seq_len, hidden), embeddings.dtype),
        # Leave both operands in HBM; the kernel copies with explicit DMA.
        in_specs=[pl.BlockSpec(memory_space=pl.ANY)],
        out_specs=pl.BlockSpec(memory_space=pl.ANY),
        scratch_shapes=[pltpu.SemaphoreType.DMA((n_stripes,))],
        # Accurate cost hint (pure DMA: read + write of the sliced bytes) so
        # XLA can overlap this op with neighboring compute.
        cost_estimate=pl.CostEstimate(
            flops=0, transcendentals=0, bytes_accessed=2 * total_bytes),
    )(embeddings)
    # TODO(synk): on v7x, if profiling shows descriptor-issue-bound behavior,
    # split stripes across the 2 TensorCores via pl.core_map.


if __name__ == "__main__":
    # model_config
    max_seq_len = 16
    hidden_size = 32

    key = jax.random.PRNGKey(0)
    k_emb, k_x = jax.random.split(key)

    # Deterministic "parameter" init (nn.Parameter(torch.empty(...)) shape).
    embeddings = jax.random.normal(
        k_emb, (max_seq_len, hidden_size), dtype=jnp.float32
    )

    # Input x: only x.shape[0] (sequence length) matters to the forward pass.
    seq_len = 8
    x = jax.random.normal(k_x, (seq_len, hidden_size), dtype=jnp.float32)

    # 1) Exercise the Pallas HBM->HBM DMA kernel (force past the small-copy
    #    fast path so the kernel actually runs at this tiny demo shape).
    out = jax.block_until_ready(pos_embed(embeddings, x, force_pallas=True))
    ref = embeddings[:seq_len, :]
    assert out.shape == (seq_len, hidden_size)
    assert out.dtype == embeddings.dtype
    assert jnp.array_equal(out, ref)

    # 2) Default dispatch (small copy -> XLA slice fast path) matches too.
    out_fast = jax.block_until_ready(pos_embed(embeddings, x))
    assert jnp.array_equal(out_fast, ref)

    # 3) Non-multiple-of-8 sequence length through the Pallas path.
    seq_len2 = 11
    x2 = jnp.zeros((seq_len2, hidden_size), dtype=jnp.float32)
    out2 = jax.block_until_ready(pos_embed(embeddings, x2, force_pallas=True))
    assert jnp.array_equal(out2, embeddings[:seq_len2, :])

    # 4) Full-length fast path: identity, no copy.
    x_full = jnp.zeros((max_seq_len, hidden_size), dtype=jnp.float32)
    out_full = jax.block_until_ready(pos_embed(embeddings, x_full))
    assert jnp.array_equal(out_full, embeddings)

    print("KERNEL_OK")
</pallas_src>

<mosaic_0001>
module attributes {stable_mosaic.version = 11 : i64} {
  func.func @kernel(%arg0: memref<16x32xf32, #tpu.memory_space<any>>, %arg1: memref<8x32xf32, #tpu.memory_space<any>>, %arg2: memref<1x!tpu.dma_semaphore, #tpu.memory_space<semaphore_mem>>) attributes {dimension_semantics = [], scalar_prefetch = 0 : i64, scratch_operands = 1 : i64, tpu.core_type = #tpu.core_type<tc>} {
    %c0_i32 = arith.constant 0 : i32
    %c0_i32_0 = arith.constant 0 : i32
    %c0_i32_1 = arith.constant 0 : i32
    %0 = tpu.memref_slice %arg0[%c0_i32_0, %c0_i32_1] : memref<16x32xf32, #tpu.memory_space<any>> -> memref<8x32xf32, #tpu.memory_space<any>>
    %c0_i32_2 = arith.constant 0 : i32
    %c0_i32_3 = arith.constant 0 : i32
    %1 = tpu.memref_slice %arg1[%c0_i32_2, %c0_i32_3] : memref<8x32xf32, #tpu.memory_space<any>> -> memref<8x32xf32, #tpu.memory_space<any>>
    %2 = tpu.memref_slice %arg2[%c0_i32] : memref<1x!tpu.dma_semaphore, #tpu.memory_space<semaphore_mem>> -> memref<1x!tpu.dma_semaphore, #tpu.memory_space<semaphore_mem>>
    %3 = tpu.memref_squeeze %2 : memref<1x!tpu.dma_semaphore, #tpu.memory_space<semaphore_mem>> -> memref<!tpu.dma_semaphore, #tpu.memory_space<semaphore_mem>>
    tpu.enqueue_dma source(%0 : memref<8x32xf32, #tpu.memory_space<any>>) target(%1 : memref<8x32xf32, #tpu.memory_space<any>>) target_semaphore(%3 : memref<!tpu.dma_semaphore, #tpu.memory_space<semaphore_mem>>)
    %c0_i32_4 = arith.constant 0 : i32
    %c0_i32_5 = arith.constant 0 : i32
    %c0_i32_6 = arith.constant 0 : i32
    %4 = tpu.memref_slice %arg0[%c0_i32_5, %c0_i32_6] : memref<16x32xf32, #tpu.memory_space<any>> -> memref<8x32xf32, #tpu.memory_space<any>>
    %c0_i32_7 = arith.constant 0 : i32
    %c0_i32_8 = arith.constant 0 : i32
    %5 = tpu.memref_slice %arg1[%c0_i32_7, %c0_i32_8] : memref<8x32xf32, #tpu.memory_space<any>> -> memref<8x32xf32, #tpu.memory_space<any>>
    %6 = tpu.memref_slice %arg2[%c0_i32_4] : memref<1x!tpu.dma_semaphore, #tpu.memory_space<semaphore_mem>> -> memref<1x!tpu.dma_semaphore, #tpu.memory_space<semaphore_mem>>
    %7 = tpu.memref_squeeze %6 : memref<1x!tpu.dma_semaphore, #tpu.memory_space<semaphore_mem>> -> memref<!tpu.dma_semaphore, #tpu.memory_space<semaphore_mem>>
    tpu.wait_dma2 semaphore(%7 : memref<!tpu.dma_semaphore, #tpu.memory_space<semaphore_mem>>) src(%4 : memref<8x32xf32, #tpu.memory_space<any>>) dst(%5 : memref<8x32xf32, #tpu.memory_space<any>>)
    return
  }
}

</mosaic_0001>

<llo_original>
// kernel: tpu_custom_call.1
$region0: #{tpu_custom_call.1}
  #allocation0 [shape = 'u32[]', space=smem, size = 0x4, offset = 0x4, fixed_abs, tag = 'smem constant byte address 0x4 - core index']
  #allocation1 [shape = 'u32[144,128]{1,0:T(1,128)}', space=vmem, size = 0x12000, scoped, tag = 'internal scratch']
  #allocation2 [shape = 's32[1]{0}', space=sflag, size = 0x4, scoped, tag = 'scratch operand']
  #allocation3 [shape = 's32[]', space=sflag, size = 0x4, offset = 0, fixed_abs, tag = 'sflag constant byte address 0x0 - dummy sync flag']
  #allocation4 [shape = 'u32[0]{0}', space=smem, size = 0, offset = 0, fixed_abs, tag = 'smem constant byte address 0x0 - null']
  %s0 = inlined_call_operand.hbm [shape: f32[16,32], index: 0, kind: input, shape index: {}]
  %s1 = inlined_call_operand.hbm [shape: f32[8,32], index: 1, kind: output, shape index: {}]
  %s2 = sld [smem:[#allocation0]]
  $region2: #{tpu_custom_call.1} parent=0
    _
  %s4 = ssub.s32 1, %s2
  %s5 = scalar_select 0, %s4, %s2
  %s7 = sshll.u32 1, 14
  %s8 = sxor.u32 4294967295, %s7
  %s11 = sshll.u32 3, 24
  %s12 = sxor.u32 4294967295, %s11
  %s13 = sand.u32 0, %s12
  %s15 = sor.u32 %s13, 0
  %18 = dma.general %s0, 128, %s1, [#allocation2], [#allocation3], [#allocation4], %s15, 0
  %s19 = smul.u32 8, 1
  %s20 = sshll.u32 %s19, 4
  %21 = dma.done [#allocation2], %s20
  %22 = vsyncmov [#allocation2]
  %s23 = vpop.sfrf %22
  %p24 = scmp.eq.s32.totalorder %s23, 0
  %p25 = pneg %p24
  %27 = shalt.err (%p25)

</llo_original>
